<compile_context>
chip_gen: v6e
topology: v6e:2x2x1
jax: 0.10.0
libtpu: 0.0.40
codegen_flags: <defaults>
</compile_context>

<pallas_src>
import functools
import math

import jax
import jax.numpy as jnp
from jax.experimental import pallas as pl
from jax.experimental.pallas import tpu as pltpu


_SUBLANE = {1: 32, 2: 16, 4: 8}  # itemsize -> sublane packing count


def _to_2tuple(v):
    if isinstance(v, (tuple, list)):
        assert len(v) == 2
        return tuple(v)
    return (v, v)


def get_pad_shape(input_hw, kernel_size, stride, dilation):
    """Mirror of AdaptivePadding.get_pad_shape (static Python math)."""
    in_h, in_w = input_hw
    kh, kw = _to_2tuple(kernel_size)
    sh, sw = _to_2tuple(stride)
    dh, dw = _to_2tuple(dilation)
    out_h = math.ceil(in_h / sh)
    out_w = math.ceil(in_w / sw)
    pad_h = max((out_h - 1) * sh + (kh - 1) * dh + 1 - in_h, 0)
    pad_w = max((out_w - 1) * sw + (kw - 1) * dw + 1 - in_w, 0)
    return pad_h, pad_w


# ---------------------------------------------------------------------------
# Kernels
# ---------------------------------------------------------------------------
def _pad_hw_kernel(x_ref, o_ref, *, top, left, in_h, in_w, out_h, out_w):
    """General path: x (tile_b, in_h, in_w) -> o (tile_b, out_h, out_w).

    Zeroes only the padding strips (static, trace-time sizes) and stores the
    interior exactly once -- every output element is written exactly once.
    """
    tb = o_ref.shape[0]
    dt = o_ref.dtype
    bottom = out_h - top - in_h
    right = out_w - left - in_w
    if top > 0:
        o_ref[:, pl.ds(0, top), :] = jnp.zeros((tb, top, out_w), dt)
    if bottom > 0:
        o_ref[:, pl.ds(top + in_h, bottom), :] = jnp.zeros((tb, bottom, out_w), dt)
    if left > 0:
        o_ref[:, pl.ds(top, in_h), pl.ds(0, left)] = jnp.zeros((tb, in_h, left), dt)
    if right > 0:
        o_ref[:, pl.ds(top, in_h), pl.ds(left + in_w, right)] = (
            jnp.zeros((tb, in_h, right), dt))
    o_ref[:, pl.ds(top, in_h), pl.ds(left, in_w)] = x_ref[...]


def _pad_rows_flat_kernel(x_ref, o_ref, *, lead_zeros, body, total):
    """Lane-dense fast path (pad_w == 0): rows flattened into the lane dim.

    x (tile_b, H*W) -> o (tile_b, out_h*W); zero [0, lead_zeros) and the tail,
    copy the body contiguously.
    """
    tb = o_ref.shape[0]
    dt = o_ref.dtype
    tail = total - lead_zeros - body
    if lead_zeros > 0:
        o_ref[:, pl.ds(0, lead_zeros)] = jnp.zeros((tb, lead_zeros), dt)
    if tail > 0:
        o_ref[:, pl.ds(lead_zeros + body, tail)] = jnp.zeros((tb, tail), dt)
    o_ref[:, pl.ds(lead_zeros, body)] = x_ref[...]


# ---------------------------------------------------------------------------
# VMEM sizing / tiling helpers (all static Python math)
# ---------------------------------------------------------------------------
def _padded_tile_bytes(rows, cols, dtype):
    """Bytes of a (rows, cols) block once laid out in (sublane, 128) tiles."""
    itemsize = jnp.dtype(dtype).itemsize
    sub = _SUBLANE.get(itemsize, 8)
    prows = -(-rows // sub) * sub
    pcols = -(-cols // 128) * 128
    return prows * pcols * itemsize


def _footprint(tile_b, *, in_rc, out_rc, dtype, flat):
    """Double-buffered VMEM footprint of one grid step (in + out blocks)."""
    if flat:
        fin = _padded_tile_bytes(tile_b, in_rc[0] * in_rc[1], dtype)
        fout = _padded_tile_bytes(tile_b, out_rc[0] * out_rc[1], dtype)
    else:
        fin = tile_b * _padded_tile_bytes(in_rc[0], in_rc[1], dtype)
        fout = tile_b * _padded_tile_bytes(out_rc[0], out_rc[1], dtype)
    return 2 * (fin + fout)  # Pallas double-buffers both in and out blocks


def _max_fit_tile(B, budget_bytes, footprint_fn):
    """Largest batch tile whose double-buffered footprint fits the budget."""
    if footprint_fn(1) > budget_bytes:
        return 1
    lo, hi = 1, B
    while lo < hi:
        mid = (lo + hi + 1) // 2
        if footprint_fn(mid) <= budget_bytes:
            lo = mid
        else:
            hi = mid - 1
    return lo


def _choose_tile_b(B, fit_tile, quantum):
    """Pick the batch tile: VMEM-feasible, >= min(B,4) steps for v7x megacore,
    even step count when possible; `quantum` is the required sublane multiple
    for the flat path (batch dim is the block's second-minor dim)."""
    fit_tile = max(1, min(fit_tile, B))
    if B <= 1:
        return 1
    # Keep >= min(B, 4) grid steps so both v7x TensorCores get work.
    fit_tile = min(fit_tile, pl.cdiv(B, min(B, 4)))
    if quantum > 1:
        if B <= quantum:
            return B  # block dim == full array dim: always a legal layout
        # sublane padding makes any tile in [1, quantum] cost the same -> safe
        fit_tile = max(quantum, (fit_tile // quantum) * quantum)
    # Nudge down (smaller blocks always still fit) until the step count is even
    # so the 2-TensorCore split is balanced.
    t = fit_tile
    while t - quantum >= 1 and pl.cdiv(B, t) % 2 != 0:
        t -= quantum
    return t if pl.cdiv(B, t) % 2 == 0 else fit_tile


# ---------------------------------------------------------------------------
# Public wrapper
# ---------------------------------------------------------------------------
def adaptive_padding(x, *, kernel_size=1, stride=1, dilation=1,
                     padding="corner", vmem_budget_bytes=12 * 1024 * 1024):
    """Pallas TPU implementation of AdaptivePadding.forward."""
    assert padding in ("same", "corner")
    assert x.ndim >= 2, "expect at least (H, W) trailing spatial dims"

    *lead, H, W = x.shape
    pad_h, pad_w = get_pad_shape((H, W), kernel_size, stride, dilation)
    if pad_h == 0 and pad_w == 0:
        return x  # nothing to do (module returns x unchanged)

    if padding == "corner":
        top, left = 0, 0
    else:  # "same"
        top, left = pad_h // 2, pad_w // 2
    out_h, out_w = H + pad_h, W + pad_w

    B = 1
    for d in lead:
        B *= d
    B = max(B, 1)

    dtype = x.dtype
    itemsize = jnp.dtype(dtype).itemsize
    sub = _SUBLANE.get(itemsize, 8)

    # Lane-dense fast path when only whole rows of padding are added.
    flat = (pad_w == 0)

    footprint_fn = functools.partial(
        _footprint, in_rc=(H, W), out_rc=(out_h, out_w), dtype=dtype, flat=flat)
    fit_tile = _max_fit_tile(B, vmem_budget_bytes, footprint_fn)
    tile_b = _choose_tile_b(B, fit_tile, sub if flat else 1)
    grid_b = pl.cdiv(B, tile_b)  # partial trailing block handled by Pallas

    footprint = footprint_fn(tile_b)
    compiler_kwargs = dict(dimension_semantics=("parallel",))
    if footprint > 12 * 1024 * 1024:
        # Even tile_b=1 exceeds the smallest scoped-VMEM default (v5e: 16 MiB);
        # raise the limit explicitly so very large spatial dims still compile.
        # TODO(synk): add a row-tiling grid axis for spatial extents too large
        # for v7x's 64 MiB physical VMEM.
        compiler_kwargs["vmem_limit_bytes"] = min(footprint + (4 << 20), 100 << 20)

    if flat:
        x2 = x.reshape(B, H * W)
        kernel = functools.partial(
            _pad_rows_flat_kernel,
            lead_zeros=top * W, body=H * W, total=out_h * out_w)
        out = pl.pallas_call(
            kernel,
            out_shape=jax.ShapeDtypeStruct((B, out_h * out_w), dtype),
            grid_spec=pltpu.PrefetchScalarGridSpec(
                num_scalar_prefetch=0,
                grid=(grid_b,),
                in_specs=[pl.BlockSpec((tile_b, H * W), lambda i: (i, 0))],
                out_specs=pl.BlockSpec((tile_b, out_h * out_w),
                                       lambda i: (i, 0)),
            ),
            compiler_params=pltpu.CompilerParams(**compiler_kwargs),
        )(x2)
    else:
        x3 = x.reshape(B, H, W)
        kernel = functools.partial(
            _pad_hw_kernel, top=top, left=left,
            in_h=H, in_w=W, out_h=out_h, out_w=out_w)
        out = pl.pallas_call(
            kernel,
            out_shape=jax.ShapeDtypeStruct((B, out_h, out_w), dtype),
            grid_spec=pltpu.PrefetchScalarGridSpec(
                num_scalar_prefetch=0,
                grid=(grid_b,),
                in_specs=[pl.BlockSpec((tile_b, H, W), lambda i: (i, 0, 0))],
                out_specs=pl.BlockSpec((tile_b, out_h, out_w),
                                       lambda i: (i, 0, 0)),
            ),
            compiler_params=pltpu.CompilerParams(**compiler_kwargs),
        )(x3)

    return out.reshape(*lead, out_h, out_w)


if __name__ == "__main__":
    key = jax.random.PRNGKey(0)
    k1, k2, k3, k4 = jax.random.split(key, 4)

    # 1) General path: pad both H and W (docstring example: k=16, s=16).
    x = jax.random.normal(k1, (2, 4, 15, 17), dtype=jnp.float32)
    ph, pw = 1, 15
    y = jax.block_until_ready(
        adaptive_padding(x, kernel_size=16, stride=16, padding="corner"))
    assert y.shape == (2, 4, 16, 32), y.shape
    assert jnp.array_equal(y, jnp.pad(x, ((0, 0), (0, 0), (0, ph), (0, pw)))), \
        "corner-mode mismatch vs reference"

    y2 = jax.block_until_ready(
        adaptive_padding(x, kernel_size=16, stride=16, padding="same"))
    assert y2.shape == (2, 4, 16, 32), y2.shape
    assert jnp.array_equal(
        y2, jnp.pad(x, ((0, 0), (0, 0),
                        (ph // 2, ph - ph // 2), (pw // 2, pw - pw // 2)))), \
        "same-mode mismatch vs reference"

    # 2) Lane-dense fast path: pad_w == 0 (H=14 -> pad_h=2, W=128 -> pad_w=0).
    xw = jax.random.normal(k2, (2, 3, 14, 128), dtype=jnp.float32)
    yw = jax.block_until_ready(
        adaptive_padding(xw, kernel_size=16, stride=16, padding="corner"))
    assert yw.shape == (2, 3, 16, 128), yw.shape
    assert jnp.array_equal(yw, jnp.pad(xw, ((0, 0), (0, 0), (0, 2), (0, 0)))), \
        "flat corner-mode mismatch vs reference"
    yw2 = jax.block_until_ready(
        adaptive_padding(xw, kernel_size=16, stride=16, padding="same"))
    assert jnp.array_equal(yw2, jnp.pad(xw, ((0, 0), (0, 0), (1, 1), (0, 0)))), \
        "flat same-mode mismatch vs reference"

    # 3) Odd batch -> exercises the partial trailing grid block.
    xo = jax.random.normal(k3, (5, 1, 15, 17), dtype=jnp.float32)
    yo = jax.block_until_ready(
        adaptive_padding(xo, kernel_size=16, stride=16, padding="corner"))
    assert yo.shape == (5, 1, 16, 32), yo.shape
    assert jnp.array_equal(yo, jnp.pad(xo, ((0, 0), (0, 0), (0, 1), (0, 15)))), \
        "odd-batch partial-block mismatch vs reference"

    # 4) No padding needed: input returned unchanged.
    xn = jax.random.normal(k4, (2, 4, 16, 16), dtype=jnp.float32)
    yn = adaptive_padding(xn, kernel_size=16, stride=16)
    assert yn.shape == xn.shape and jnp.array_equal(yn, xn)

    print("KERNEL_OK")
</pallas_src>

<mosaic_0001>
module attributes {stable_mosaic.version = 11 : i64} {
  func.func @_pad_hw_kernel(%arg0: i32, %arg1: memref<2x15x17xf32, #tpu.memory_space<vmem>>, %arg2: memref<2x16x32xf32, #tpu.memory_space<vmem>>) attributes {dimension_semantics = [#tpu.dimension_semantics<parallel>], iteration_bounds = array<i64: 4>, scalar_prefetch = 0 : i64, scratch_operands = 0 : i64, tpu.core_type = #tpu.core_type<tc>, window_params = [{transform_indices = @transform_0, window_bounds = array<i64: 2, 15, 17>}, {transform_indices = @transform_1, window_bounds = array<i64: 2, 16, 32>}]} {
    %cst = arith.constant 0.000000e+00 : f32
    %0 = vector.broadcast %cst : f32 to vector<2x1x32xf32>
    %c0 = arith.constant 0 : index
    %c15 = arith.constant 15 : index
    %c0_0 = arith.constant 0 : index
    %1 = vector.load %arg2[%c0, %c15, %c0_0] : memref<2x16x32xf32, #tpu.memory_space<vmem>>, vector<2x1x32xf32>
    tpu.vector_store %arg2[%c0, %c15, %c0_0], %0 {strides = array<i32>} : memref<2x16x32xf32, #tpu.memory_space<vmem>>, vector<2x1x32xf32>,
    %cst_1 = arith.constant 0.000000e+00 : f32
    %2 = vector.broadcast %cst_1 : f32 to vector<2x15x15xf32>
    %c0_2 = arith.constant 0 : index
    %c0_3 = arith.constant 0 : index
    %c17 = arith.constant 17 : index
    %3 = vector.load %arg2[%c0_2, %c0_3, %c17] : memref<2x16x32xf32, #tpu.memory_space<vmem>>, vector<2x15x15xf32>
    tpu.vector_store %arg2[%c0_2, %c0_3, %c17], %2 {strides = array<i32>} : memref<2x16x32xf32, #tpu.memory_space<vmem>>, vector<2x15x15xf32>,
    %c0_4 = arith.constant 0 : index
    %c0_5 = arith.constant 0 : index
    %c0_6 = arith.constant 0 : index
    %4 = vector.load %arg1[%c0_4, %c0_5, %c0_6] : memref<2x15x17xf32, #tpu.memory_space<vmem>>, vector<2x15x17xf32>
    %c0_7 = arith.constant 0 : index
    %c0_8 = arith.constant 0 : index
    %c0_9 = arith.constant 0 : index
    %5 = vector.load %arg2[%c0_7, %c0_8, %c0_9] : memref<2x16x32xf32, #tpu.memory_space<vmem>>, vector<2x15x17xf32>
    tpu.vector_store %arg2[%c0_7, %c0_8, %c0_9], %4 {strides = array<i32>} : memref<2x16x32xf32, #tpu.memory_space<vmem>>, vector<2x15x17xf32>,
    return
  }
  func.func @transform_0(%arg0: i32) -> (i32, i32, i32) {
    %c0_i32 = arith.constant 0 : i32
    %c0_i32_0 = arith.constant 0 : i32
    %c0_i32_1 = arith.constant 0 : i32
    return %arg0, %c0_i32, %c0_i32_0 : i32, i32, i32
  }
  func.func @transform_1(%arg0: i32) -> (i32, i32, i32) {
    %c0_i32 = arith.constant 0 : i32
    %c0_i32_0 = arith.constant 0 : i32
    %c0_i32_1 = arith.constant 0 : i32
    return %arg0, %c0_i32, %c0_i32_0 : i32, i32, i32
  }
}

</mosaic_0001>

<llo_original>
// kernel: tpu_custom_call.1
$region0: #{tpu_custom_call.1}
  #allocation0 [shape = 'u32[]', space=smem, size = 0x4, offset = 0x4, fixed_abs, tag = 'smem constant byte address 0x4 - core index']
  #allocation1 [shape = 'u32[144,128]{1,0:T(1,128)}', space=vmem, size = 0x12000, scoped, tag = 'internal scratch']
  %s0 = inlined_call_operand.vmem [shape: f32[8,15,17], index: 0, kind: input, shape index: {}]
  %s1 = inlined_call_operand.hbm [shape: f32[8,16,32], index: 1, kind: output, shape index: {}]
  %s2 = sld [smem:[#allocation0]]
  $region37: #{tpu_custom_call.1} parent=0
    _
  %s4 = ssub.s32 1, %s2
  %s5 = scalar_select 0, %s4, %s2
  $region1: #{tpu_custom_call.1} parent=0
    #allocation2 [shape = 'u8[32768]{0}', space=vmem, size = 0x8000, scoped, tag = 'output window, operand 0']
    #allocation3 [shape = 's32[2]{0}', space=sflag, size = 0x8, scoped, tag = 'scoped memory for tpu_custom_call.1']
    %6 = vsyncpa [#allocation3], 0
    %s7 = scalar_lea.sflag [#allocation3], 1
    %8 = vsyncpa %s7, 0
    loop: start=0, step=1, limit=6
    $region2: #{tpu_custom_call.1} parent=1 // loop_pre_header
      _
    $region3: #{tpu_custom_call.1} parent=1 // loop_header
      %s10 = sphi 0, %s14
      %p11 = scmp.ge.s32.totalorder %s10, 6
      %s20 = sphi 0, %s22
      %s23 = sphi 0, %s20
      %s24 = sphi 0, %s23
      %s40 = sphi 0, %s24
      %s46 = sphi 0, %s48
      %s49 = sphi 0, %s46
      %s50 = sphi 0, %s49
      %s66 = sphi 0, %s50
    $region4: #{tpu_custom_call.1} parent=1 // loop_header_branch
      %13 = sbr.rel (%p11) target = $region8
    $region5: #{tpu_custom_call.1} parent=1 // loop_body
      %s15 = ssub.s32 %s10, 1
      %s16 = ssub.s32 %s10, 2
      %s17 = sadd.s32 %s10, 1
      %s18 = ssub.s32 %s10, %s17
      %p19 = scmp.eq.s32.totalorder %s18, 0
      %s21 = sadd.s32 %s20, 1
      %s22 = scalar_select %p19, %s20, %s21
      %p25 = pneg %p19
      %p26 = scmp.eq.s32.totalorder %s10, 3
      %p27 = por %p25, %p26
      %p28 = scmp.ne.s32.totalorder %s20, %s23
      %p29 = scmp.eq.s32.totalorder %s10, 0
      %p30 = por %p28, %p29
      %p31 = scmp.ne.s32.totalorder %s20, %s23
      %p32 = scmp.eq.s32.totalorder %s15, 3
      %p33 = por %p31, %p32
      %p34 = scmp.ne.s32.totalorder %s23, %s24
      %p35 = scmp.eq.s32.totalorder %s15, 0
      %p36 = por %p34, %p35
      %p37 = scmp.ne.s32.totalorder %s23, %s24
      %p38 = scmp.eq.s32.totalorder %s16, 3
      %p39 = por %p37, %p38
      %p41 = scmp.ne.s32.totalorder %s24, %s40
      %p42 = scmp.eq.s32.totalorder %s16, 0
      %p43 = por %p41, %p42
      %s44 = ssub.s32 %s10, %s17
      %p45 = scmp.eq.s32.totalorder %s44, 0
      %s47 = sadd.s32 %s46, 1
      %s48 = scalar_select %p45, %s46, %s47
      %p51 = pneg %p45
      %p52 = scmp.eq.s32.totalorder %s10, 3
      %p53 = por %p51, %p52
      %p54 = scmp.ne.s32.totalorder %s46, %s49
      %p55 = scmp.eq.s32.totalorder %s10, 0
      %p56 = por %p54, %p55
      %p57 = scmp.ne.s32.totalorder %s46, %s49
      %p58 = scmp.eq.s32.totalorder %s15, 3
      %p59 = por %p57, %p58
      %p60 = scmp.ne.s32.totalorder %s49, %s50
      %p61 = scmp.eq.s32.totalorder %s15, 0
      %p62 = por %p60, %p61
      %p63 = scmp.ne.s32.totalorder %s49, %s50
      %p64 = scmp.eq.s32.totalorder %s16, 3
      %p65 = por %p63, %p64
      %p67 = scmp.ne.s32.totalorder %s50, %s66
      %p68 = scmp.eq.s32.totalorder %s16, 0
      %p69 = por %p67, %p68
      %p70 = scmp.le.s32.totalorder 1, %s10
      %p71 = scmp.lt.s32.totalorder %s10, 5
      %p72 = pnand %p70, %p71
      %p73 = pneg %p72
      // Predicated region
      $region9: #{tpu_custom_call.1} parent=5 // pred_check
        _
      $region10: #{tpu_custom_call.1} parent=5 // pred_check_branch
        %75 = sbr.rel (%p72) target = $region12
      $region11: #{tpu_custom_call.1} parent=5 // pred_region
        %s76 = ssub.s32 %s10, 1
      $region12: #{tpu_custom_call.1} parent=5 // pred_fallthru
        _
      %p77 = scmp.lt.s32.totalorder %s10, 4
      // Predicated region
      $region13: #{tpu_custom_call.1} parent=5 // pred_check
        %p78 = pneg %p77
      $region14: #{tpu_custom_call.1} parent=5 // pred_check_branch
        %80 = sbr.rel (%p78) target = $region16
      $region15: #{tpu_custom_call.1} parent=5 // pred_region
        // Predicated region
        $region17: #{tpu_custom_call.1} parent=15 // pred_check
          %p81 = pneg %p30
        $region18: #{tpu_custom_call.1} parent=15 // pred_check_branch
          %83 = sbr.rel (%p81) target = $region20
        $region19: #{tpu_custom_call.1} parent=15 // pred_region
          %s84 = smul.u32 2, %s10
          %p85 = scmp.lt.s32.totalorder %s84, 7
          %s86 = scalar_select %p85, %s84, 7
          %s87 = smul.addr %s86, 2
          %s88 = smul.addr %s87, 8
          %s89 = scalar_lea.vmem %s0, %s88
          %s90 = smul.u32 2, %s10
        $region20: #{tpu_custom_call.1} parent=15 // pred_fallthru
          _
      $region16: #{tpu_custom_call.1} parent=5 // pred_fallthru
        _
      %p91 = scmp.le.s32.totalorder 1, %s10
      %p92 = scmp.lt.s32.totalorder %s10, 5
      %p93 = pnand %p91, %p92
      %p94 = pneg %p93
      // Predicated region
      $region21: #{tpu_custom_call.1} parent=5 // pred_check
        _
      $region22: #{tpu_custom_call.1} parent=5 // pred_check_branch
        %96 = sbr.rel (%p93) target = $region24
      $region23: #{tpu_custom_call.1} parent=5 // pred_region
        %s97 = ssub.s32 %s10, 1
        %s98 = smul.u32 2, %s15
        %p99 = scmp.lt.s32.totalorder %s98, 7
        %s100 = scalar_select %p99, %s98, 7
        %s101 = smul.addr %s100, 2
        %s102 = smul.addr %s101, 8
        %s103 = scalar_lea.vmem %s0, %s102
        %p104 = pneg %p36
        %p105 = pneg %p33
        %p106 = pneg %p62
        %p107 = pneg %p59
        %s108 = sand.u32 %s49, 1
        %s109 = scalar_lea.sflag [#allocation3], %s108
        %s110 = sand.u32 %s49, 1
        %s111 = smul.addr %s110, 32
        %s112 = scalar_lea.vmem [#allocation2], %s111
        %s113 = smul.u32 2, %s15
        %p114 = scmp.lt.s32.totalorder %s113, 7
        %s115 = scalar_select %p114, %s113, 7
        %s116 = smul.addr %s115, 2
        %s117 = smul.addr %s116, 8
        %s118 = scalar_lea.vmem %s0, %s117
        %s119 = smul.u32 2, %s15
        %s120 = smul.u32 2, %s15
        %vm121 = vcmask 253952
        %122 = vst.msk [vmem:[%s112 + $0xf] sm:$0x1] %vm121, 0.0
        %123 = vst.msk [vmem:[%s112 + $0x1f] sm:$0x1] %vm121, 0.0
        %vm124 = vcmask 261256
        %125 = vst.msk [vmem:[%s112] sm:$0xff] %vm124, 0.0
        %vm126 = vcmask 260232
        %127 = vst.msk [vmem:[%s112 + $0x8] sm:$0x7f] %vm126, 0.0
        %128 = vst.msk [vmem:[%s112 + $0x10] sm:$0xff] %vm124, 0.0
        %129 = vst.msk [vmem:[%s112 + $0x18] sm:$0x7f] %vm126, 0.0
        %v130 = vld [vmem:[%s118] sm:$0xff]
        %v131 = vld [vmem:[%s118 + $0x8] sm:$0x7f]
        %v132 = vld [vmem:[%s118 + $0x10] sm:$0xff]
        %v133 = vld [vmem:[%s118 + $0x18] sm:$0x7f]
        %vm134 = vcmask 138240
        %135 = vst.msk [vmem:[%s112] sm:$0xff] %vm134, %v130
        %vm136 = vcmask 137216
        %137 = vst.msk [vmem:[%s112 + $0x8] sm:$0x7f] %vm136, %v131
        %138 = vst.msk [vmem:[%s112 + $0x10] sm:$0xff] %vm134, %v132
        %139 = vst.msk [vmem:[%s112 + $0x18] sm:$0x7f] %vm136, %v133
        %s140 = sand.u32 %s49, 1
        %s141 = scalar_lea.sflag [#allocation3], %s140
        %s142 = sand.u32 %s49, 1
        %s143 = smul.addr %s142, 32
        %s144 = scalar_lea.vmem [#allocation2], %s143
        // Predicated region
        $region25: #{tpu_custom_call.1} parent=23 // pred_check
          %p145 = pneg %p59
        $region26: #{tpu_custom_call.1} parent=23 // pred_check_branch
          %147 = sbr.rel (%p145) target = $region28
        $region27: #{tpu_custom_call.1} parent=23 // pred_region
          %s148 = smul.u32 2, %s15
          %s150 = ssub.s32 512, 512
          %151 = vsyncadd %s141, %s150
          %s152 = smul.addr %s148, 2
          %s153 = smul.addr %s152, 128
          %s154 = scalar_lea.hbm %s1, %s153
          %s155 = sshll.u32 %s144, 4
          %s156 = int_to_ptr.vmem [resolvable:$true] %s155
          %161 = dma.vmem_to_hbm [thread:$0]  %s156, 512, %s154, %s141, 128, 128, 8
        $region28: #{tpu_custom_call.1} parent=23 // pred_fallthru
          _
      $region24: #{tpu_custom_call.1} parent=5 // pred_fallthru
        _
      %p162 = scmp.le.s32.totalorder 2, %s10
      // Predicated region
      $region29: #{tpu_custom_call.1} parent=5 // pred_check
        %p163 = pneg %p162
      $region30: #{tpu_custom_call.1} parent=5 // pred_check_branch
        %165 = sbr.rel (%p163) target = $region32
      $region31: #{tpu_custom_call.1} parent=5 // pred_region
        %s166 = ssub.s32 %s10, 2
        // Predicated region
        $region33: #{tpu_custom_call.1} parent=31 // pred_check
          %p167 = pneg %p65
        $region34: #{tpu_custom_call.1} parent=31 // pred_check_branch
          %169 = sbr.rel (%p167) target = $region36
        $region35: #{tpu_custom_call.1} parent=31 // pred_region
          %s170 = sand.u32 %s50, 1
          %s171 = scalar_lea.sflag [#allocation3], %s170
          %s172 = sand.u32 %s50, 1
          %s173 = smul.addr %s172, 32
          %s174 = scalar_lea.vmem [#allocation2], %s173
          %175 = dma.done %s171, 512
        $region36: #{tpu_custom_call.1} parent=31 // pred_fallthru
          _
      $region32: #{tpu_custom_call.1} parent=5 // pred_fallthru
        _
    $region6: #{tpu_custom_call.1} parent=1 // loop_footer
      %s14 = sadd.s32 1, %s10
    $region7: #{tpu_custom_call.1} parent=1 // loop_footer_branch
      %9 = sbr.rel target = $region3
    $region8: #{tpu_custom_call.1} parent=1 // loop_exit
      _
    %176 = vsyncpa [#allocation3], 1
    %s177 = scalar_lea.sflag [#allocation3], 1
    %178 = vsyncpa %s177, 1

</llo_original>
